<compile_context>
chip_gen: v6e
topology: v6e:2x2x1
jax: 0.10.0
libtpu: 0.0.40
codegen_flags: <defaults>
</compile_context>

<pallas_src>
import math

import jax
import jax.numpy as jnp
from jax import lax
from jax.experimental import pallas as pl
from jax.experimental.pallas import tpu as pltpu


def popart_kernel(x_ref, w_ref, stats_ref, out_t_ref, norm_t_ref):
    # x_ref:      (tm, K)   input rows (rows on sublanes, K lane-dense)
    # w_ref:      (N, K)    weights, lane-dense rows (N = output_dim)
    # stats_ref:  (N, 3)    column 0 = bias, 1 = mu, 2 = sigma   (f32)
    # out_t_ref:  (N, tm)   de-normalized output, lane-dense (transposed)
    # norm_t_ref: (N, tm)   normalized (linear) output, lane-dense
    norm = lax.dot_general(
        w_ref[...], x_ref[...],
        dimension_numbers=(((1,), (1,)), ((), ())),   # contract K with K
        preferred_element_type=jnp.float32)           # (N, tm), f32 accum
    norm = norm + stats_ref[:, 0:1]                   # + bias (lane broadcast)
    norm_t_ref[...] = norm.astype(norm_t_ref.dtype)
    out_t_ref[...] = (norm * stats_ref[:, 2:3]
                      + stats_ref[:, 1:2]).astype(out_t_ref.dtype)


def popart_forward(x, weights, bias, mu, sigma, task=None, *,
                   tm=512, compute_dtype=jnp.float32):
    """PopArtLayer.forward.

    x:       [T, B, input_dim]  (or [T, B] when input_dim == 1, like torch)
    weights: [output_dim, input_dim]
    bias, mu, sigma: [output_dim]
    Returns [output, normalized_output] with the trailing output_dim squeezed
    when it is 1 (after optional task gather), matching the PyTorch module.
    """
    out_dim, in_dim = weights.shape
    if x.ndim == 2:                      # mirrors the PyTorch unsqueeze(-1)
        x = x[..., None]
    lead_shape = x.shape[:-1]
    xm = x.reshape(-1, in_dim).astype(compute_dtype)
    M = xm.shape[0]

    # Row tile: multiple of 128 (lane-dense output blocks), clamped to the
    # data size, and kept small enough to yield >= 2 parallel grid steps
    # when the data allows (so both v7x TensorCores get work).
    tm = max(128, (tm // 128) * 128)
    m_round = ((M + 127) // 128) * 128
    tm = min(tm, m_round)
    if m_round >= 2 * 128 and tm > m_round // 2:
        tm = max(128, (m_round // 2) // 128 * 128)
    m_pad = pl.cdiv(M, tm) * tm
    if m_pad != M:
        xm = jnp.pad(xm, ((0, m_pad - M), (0, 0)))

    w = weights.astype(compute_dtype)                            # (N, K)
    stats = jnp.stack([bias.astype(jnp.float32),
                       mu.astype(jnp.float32),
                       sigma.astype(jnp.float32)], axis=-1)      # (N, 3)

    grid = (m_pad // tm,)
    out_t, norm_t = pl.pallas_call(
        popart_kernel,
        out_shape=(
            jax.ShapeDtypeStruct((out_dim, m_pad), jnp.float32),
            jax.ShapeDtypeStruct((out_dim, m_pad), jnp.float32),
        ),
        grid_spec=pltpu.PrefetchScalarGridSpec(
            num_scalar_prefetch=0,
            grid=grid,
            in_specs=[
                pl.BlockSpec((tm, in_dim), lambda i: (i, 0)),       # x tile
                pl.BlockSpec((out_dim, in_dim), lambda i: (0, 0)),  # weights
                pl.BlockSpec((out_dim, 3), lambda i: (0, 0)),       # bias/mu/sigma
            ],
            out_specs=[
                pl.BlockSpec((out_dim, tm), lambda i: (0, i)),
                pl.BlockSpec((out_dim, tm), lambda i: (0, i)),
            ],
        ),
        compiler_params=pltpu.CompilerParams(
            dimension_semantics=("parallel",),
            vmem_limit_bytes=32 * 1024 * 1024),
    )(xm, w, stats)

    out = out_t.T[:M].reshape(*lead_shape, out_dim)
    norm = norm_t.T[:M].reshape(*lead_shape, out_dim)

    if task is not None:
        # gather over the output_dim axis (plain-JAX glue, = .gather(-1, ...))
        out = jnp.take_along_axis(out, task[..., None], axis=-1)
        norm = jnp.take_along_axis(norm, task[..., None], axis=-1)

    def _squeeze_last(a):                # torch .squeeze(-1) semantics
        return jnp.squeeze(a, -1) if a.shape[-1] == 1 else a

    return [_squeeze_last(out), _squeeze_last(norm)]


def popart_ref(x, weights, bias, mu, sigma, task=None):
    """Pure-JAX reference mirroring the PyTorch forward."""
    if x.ndim == 2:
        x = x[..., None]
    lead = x.shape[:-1]
    out_dim, in_dim = weights.shape
    norm = x.reshape(-1, in_dim) @ weights.T + bias[None, :]
    norm = norm.reshape(*lead, out_dim)
    out = norm * sigma + mu
    if task is not None:
        out = jnp.take_along_axis(out, task[..., None], axis=-1)
        norm = jnp.take_along_axis(norm, task[..., None], axis=-1)
    sq = lambda a: jnp.squeeze(a, -1) if a.shape[-1] == 1 else a
    return sq(out), sq(norm)


def init_popart_params(key, input_dim, output_dim):
    """Deterministic init mirroring PopArtLayer.reset_parameters()."""
    kw, kb = jax.random.split(key)
    fan_in = input_dim
    w_bound = math.sqrt(1.0 / fan_in)      # kaiming_uniform_(a=sqrt(5))
    weights = jax.random.uniform(
        kw, (output_dim, input_dim), jnp.float32, -w_bound, w_bound)
    b_bound = 1.0 / math.sqrt(fan_in)
    bias = jax.random.uniform(kb, (output_dim,), jnp.float32, -b_bound, b_bound)
    mu = jnp.zeros((output_dim,), jnp.float32)
    sigma = jnp.ones((output_dim,), jnp.float32)
    return weights, bias, mu, sigma


if __name__ == "__main__":
    key = jax.random.PRNGKey(0)
    k_in, k_param, k_in2, k_param2, k_task = jax.random.split(key, 5)

    fwd = jax.jit(popart_forward, static_argnames=("tm", "compute_dtype"))

    # ---- case 1: module defaults (output_dim=1), M not a tile multiple ----
    T, B = 6, 20                          # M = 120 -> padded to 128 inside
    input_dim, output_dim = 256, 1
    x = jax.random.normal(k_in, (T, B, input_dim), jnp.float32)
    weights, bias, mu, sigma = init_popart_params(k_param, input_dim, output_dim)
    mu = mu + 0.5                         # non-trivial buffers so the
    sigma = sigma * 2.0                   # de-normalize branch is exercised

    output, normalized = fwd(x, weights, bias, mu, sigma, tm=512)
    jax.block_until_ready((output, normalized))

    ref_out, ref_norm = popart_ref(x, weights, bias, mu, sigma)
    assert output.shape == (T, B) and normalized.shape == (T, B)
    assert jnp.allclose(normalized, ref_norm, atol=1e-5)
    assert jnp.allclose(output, ref_out, atol=1e-5)

    # bf16 input path (halves dominant HBM read traffic, f32 accumulation)
    out_bf, norm_bf = fwd(x, weights, bias, mu, sigma, tm=512,
                          compute_dtype=jnp.bfloat16)
    jax.block_until_ready((out_bf, norm_bf))
    assert jnp.allclose(norm_bf, ref_norm, atol=5e-2)
    assert jnp.allclose(out_bf, ref_out, atol=1e-1)

    # ---- case 2: output_dim > 1 with a task gather (squeeze guard path) ----
    T2, B2, out2 = 4, 8, 4
    x2 = jax.random.normal(k_in2, (T2, B2, input_dim), jnp.float32)
    w2, b2, mu2, sg2 = init_popart_params(k_param2, input_dim, out2)
    task = jax.random.randint(k_task, (T2, B2), 0, out2)
    o2, n2 = fwd(x2, w2, b2, mu2, sg2, task, tm=256)
    jax.block_until_ready((o2, n2))
    r_o2, r_n2 = popart_ref(x2, w2, b2, mu2, sg2, task)
    assert o2.shape == (T2, B2) and n2.shape == (T2, B2)
    assert jnp.allclose(n2, r_n2, atol=1e-5)
    assert jnp.allclose(o2, r_o2, atol=1e-5)

    # TODO(synk): PopArt normalize / update_parameters are no-grad,
    # training-time buffer updates (not part of forward); not implemented here.
    print("KERNEL_OK")
</pallas_src>

<mosaic_0001>
module attributes {stable_mosaic.version = 11 : i64} {
  func.func @popart_kernel(%arg0: i32, %arg1: memref<128x256xf32, #tpu.memory_space<vmem>>, %arg2: memref<1x256xf32, #tpu.memory_space<vmem>>, %arg3: memref<1x3xf32, #tpu.memory_space<vmem>>, %arg4: memref<1x128xf32, #tpu.memory_space<vmem>>, %arg5: memref<1x128xf32, #tpu.memory_space<vmem>>) attributes {dimension_semantics = [#tpu.dimension_semantics<parallel>], iteration_bounds = array<i64: 1>, scalar_prefetch = 0 : i64, scratch_operands = 0 : i64, tpu.core_type = #tpu.core_type<tc>, window_params = [{transform_indices = @transform_0, window_bounds = array<i64: 128, 256>}, {pipeline_mode = #tpu.pipeline_mode<synchronous>, transform_indices = @transform_1, window_bounds = array<i64: 1, 256>}, {pipeline_mode = #tpu.pipeline_mode<synchronous>, transform_indices = @transform_2, window_bounds = array<i64: 1, 3>}, {transform_indices = @transform_3, window_bounds = array<i64: 1, 128>}, {transform_indices = @transform_4, window_bounds = array<i64: 1, 128>}]} {
    %c0 = arith.constant 0 : index
    %c0_0 = arith.constant 0 : index
    %0 = vector.load %arg2[%c0, %c0_0] : memref<1x256xf32, #tpu.memory_space<vmem>>, vector<1x256xf32>
    %c0_1 = arith.constant 0 : index
    %c0_2 = arith.constant 0 : index
    %1 = vector.load %arg1[%c0_1, %c0_2] : memref<128x256xf32, #tpu.memory_space<vmem>>, vector<128x256xf32>
    %cst = arith.constant dense<0.000000e+00> : vector<1x128xf32>
    %2 = tpu.matmul %0, %1, %cst {dimension_numbers = #tpu.dot_dimension_numbers<[1], [1], [0], [0], [0, 0, 1, 0], [], []>} : vector<1x256xf32>, vector<128x256xf32>, vector<1x128xf32> -> vector<1x128xf32>
    %c0_3 = arith.constant 0 : index
    %c0_4 = arith.constant 0 : index
    %3 = vector.load %arg3[%c0_3, %c0_4] : memref<1x3xf32, #tpu.memory_space<vmem>>, vector<1x1xf32>
    %4 = vector.broadcast %3 : vector<1x1xf32> to vector<1x128xf32>
    %5 = arith.addf %2, %4 : vector<1x128xf32>
    %c0_5 = arith.constant 0 : index
    %c0_6 = arith.constant 0 : index
    %6 = vector.load %arg5[%c0_5, %c0_6] : memref<1x128xf32, #tpu.memory_space<vmem>>, vector<1x128xf32>
    tpu.vector_store %arg5[%c0_5, %c0_6], %5 {strides = array<i32>} : memref<1x128xf32, #tpu.memory_space<vmem>>, vector<1x128xf32>,
    %c0_7 = arith.constant 0 : index
    %c2 = arith.constant 2 : index
    %7 = vector.load %arg3[%c0_7, %c2] : memref<1x3xf32, #tpu.memory_space<vmem>>, vector<1x1xf32>
    %8 = vector.broadcast %7 : vector<1x1xf32> to vector<1x128xf32>
    %9 = arith.mulf %5, %8 : vector<1x128xf32>
    %c0_8 = arith.constant 0 : index
    %c1 = arith.constant 1 : index
    %10 = vector.load %arg3[%c0_8, %c1] : memref<1x3xf32, #tpu.memory_space<vmem>>, vector<1x1xf32>
    %11 = vector.broadcast %10 : vector<1x1xf32> to vector<1x128xf32>
    %12 = arith.addf %9, %11 : vector<1x128xf32>
    %c0_9 = arith.constant 0 : index
    %c0_10 = arith.constant 0 : index
    %13 = vector.load %arg4[%c0_9, %c0_10] : memref<1x128xf32, #tpu.memory_space<vmem>>, vector<1x128xf32>
    tpu.vector_store %arg4[%c0_9, %c0_10], %12 {strides = array<i32>} : memref<1x128xf32, #tpu.memory_space<vmem>>, vector<1x128xf32>,
    return
  }
  func.func @transform_0(%arg0: i32) -> (i32, i32) {
    %c0_i32 = arith.constant 0 : i32
    %c0_i32_0 = arith.constant 0 : i32
    return %arg0, %c0_i32 : i32, i32
  }
  func.func @transform_1(%arg0: i32) -> (i32, i32) {
    %c0_i32 = arith.constant 0 : i32
    %c0_i32_0 = arith.constant 0 : i32
    %c0_i32_1 = arith.constant 0 : i32
    return %c0_i32, %c0_i32_0 : i32, i32
  }
  func.func @transform_2(%arg0: i32) -> (i32, i32) {
    %c0_i32 = arith.constant 0 : i32
    %c0_i32_0 = arith.constant 0 : i32
    %c0_i32_1 = arith.constant 0 : i32
    return %c0_i32, %c0_i32_0 : i32, i32
  }
  func.func @transform_3(%arg0: i32) -> (i32, i32) {
    %c0_i32 = arith.constant 0 : i32
    %c0_i32_0 = arith.constant 0 : i32
    return %c0_i32, %arg0 : i32, i32
  }
  func.func @transform_4(%arg0: i32) -> (i32, i32) {
    %c0_i32 = arith.constant 0 : i32
    %c0_i32_0 = arith.constant 0 : i32
    return %c0_i32, %arg0 : i32, i32
  }
}

</mosaic_0001>

<llo_original>
// kernel: popart_forward.1
$region0: #{popart_forward.1}
  #allocation0 [shape = 'u32[]', space=smem, size = 0x4, offset = 0x4, fixed_abs, tag = 'smem constant byte address 0x4 - core index']
  #allocation1 [shape = 'u32[144,128]{1,0:T(1,128)}', space=vmem, size = 0x12000, scoped, tag = 'internal scratch']
  %s0 = inlined_call_operand.vmem [shape: f32[128,256], index: 0, kind: input, shape index: {}]
  %s1 = inlined_call_operand.vmem [shape: f32[1,256], index: 1, kind: input, shape index: {}]
  %s2 = inlined_call_operand.vmem [shape: f32[1,3], index: 2, kind: input, shape index: {}]
  %s3 = inlined_call_operand.vmem [shape: f32[1,128], index: 3, kind: output, shape index: {0}]
  %s4 = inlined_call_operand.vmem [shape: f32[1,128], index: 4, kind: output, shape index: {1}]
  %5 = xla_tuple %s3, %s4
  %s6 = sld [smem:[#allocation0]]
  $region30: #{popart_forward.1} parent=0
    _
  %s8 = ssub.s32 1, %s6
  %s9 = scalar_select 0, %s8, %s6
  // Predicated region
  $region2: #{popart_forward.1} parent=0 // pred_check
    _
  $region3: #{popart_forward.1} parent=0 // pred_check_branch
    %11 = sbr.rel (0) target = $region5
  $region4: #{popart_forward.1} parent=0 // pred_region
    _
  $region5: #{popart_forward.1} parent=0 // pred_fallthru
    _
  // Predicated region
  $region6: #{popart_forward.1} parent=0 // pred_check
    _
  $region7: #{popart_forward.1} parent=0 // pred_check_branch
    %13 = sbr.rel (0) target = $region9
  $region8: #{popart_forward.1} parent=0 // pred_region
    _
  $region9: #{popart_forward.1} parent=0 // pred_fallthru
    _
  // Predicated region
  $region10: #{popart_forward.1} parent=0 // pred_check
    _
  $region11: #{popart_forward.1} parent=0 // pred_check_branch
    %15 = sbr.rel (0) target = $region13
  $region12: #{popart_forward.1} parent=0 // pred_region
    _
  $region13: #{popart_forward.1} parent=0 // pred_fallthru
    _
  %v16 = vld [vmem:[%s1] sm:$0x3]
  %v17 = vld [vmem:[%s0] sm:$0xff]
  %v18 = vld [vmem:[%s0 + $0x8] sm:$0xff]
  %v19 = vld [vmem:[%s0 + $0x10] sm:$0xff]
  %v20 = vld [vmem:[%s0 + $0x18] sm:$0xff]
  %v21 = vld [vmem:[%s0 + $0x20] sm:$0xff]
  %v22 = vld [vmem:[%s0 + $0x28] sm:$0xff]
  %v23 = vld [vmem:[%s0 + $0x30] sm:$0xff]
  %v24 = vld [vmem:[%s0 + $0x38] sm:$0xff]
  %v25 = vld [vmem:[%s0 + $0x40] sm:$0xff]
  %v26 = vld [vmem:[%s0 + $0x48] sm:$0xff]
  %v27 = vld [vmem:[%s0 + $0x50] sm:$0xff]
  %v28 = vld [vmem:[%s0 + $0x58] sm:$0xff]
  %v29 = vld [vmem:[%s0 + $0x60] sm:$0xff]
  %v30 = vld [vmem:[%s0 + $0x68] sm:$0xff]
  %v31 = vld [vmem:[%s0 + $0x70] sm:$0xff]
  %v32 = vld [vmem:[%s0 + $0x78] sm:$0xff]
  %v33 = vld [vmem:[%s0 + $0x80] sm:$0xff]
  %v34 = vld [vmem:[%s0 + $0x88] sm:$0xff]
  %v35 = vld [vmem:[%s0 + $0x90] sm:$0xff]
  %v36 = vld [vmem:[%s0 + $0x98] sm:$0xff]
  %v37 = vld [vmem:[%s0 + $0xa0] sm:$0xff]
  %v38 = vld [vmem:[%s0 + $0xa8] sm:$0xff]
  %v39 = vld [vmem:[%s0 + $0xb0] sm:$0xff]
  %v40 = vld [vmem:[%s0 + $0xb8] sm:$0xff]
  %v41 = vld [vmem:[%s0 + $0xc0] sm:$0xff]
  %v42 = vld [vmem:[%s0 + $0xc8] sm:$0xff]
  %v43 = vld [vmem:[%s0 + $0xd0] sm:$0xff]
  %v44 = vld [vmem:[%s0 + $0xd8] sm:$0xff]
  %v45 = vld [vmem:[%s0 + $0xe0] sm:$0xff]
  %v46 = vld [vmem:[%s0 + $0xe8] sm:$0xff]
  %v47 = vld [vmem:[%s0 + $0xf0] sm:$0xff]
  %v48 = vld [vmem:[%s0 + $0xf8] sm:$0xff]
  %v49 = vld [vmem:[%s2] sm:$0x1]
  %51 = vset.pattern.permute.xlu0 0
  %52 = vperm.xlu0 %51, %v49
  %v53 = vpop.permute.xlu0 %52
  %v55 = vlaneseq
  %v56 = vshrl.u32 %v55, 7
  %v57 = vsub.s32 0, %v56
  %v58 = vrot.slane %v53, %v57
  %v60 = vlaneseq
  %v61 = vshrl.u32 %v60, 7
  %v62 = vsub.s32 0, %v61
  %v63 = vrot.slane %v16, %v62
  %v64 = vlaneseq
  %v65 = vshrl.u32 %v64, 7
  %v66 = vsub.s32 1, %v65
  %v67 = vrot.slane %v16, %v66
  %70 = vmatprep.subr.mxu0 %v48
  %71 = vmatpush1.xpose.msra.mxu0 %v47
  %72 = vmatprep.subr.mxu0 %v46
  %73 = vmatpush1.xpose.msra.mxu0 %v45
  %74 = vmatprep.subr.mxu0 %v44
  %75 = vmatpush1.xpose.msra.mxu0 %v43
  %76 = vmatprep.subr.mxu0 %v42
  %77 = vmatpush1.xpose.msra.mxu0 %v41
  %78 = vmatprep.subr.mxu0 %v40
  %79 = vmatpush1.xpose.msra.mxu0 %v39
  %80 = vmatprep.subr.mxu0 %v38
  %81 = vmatpush1.xpose.msra.mxu0 %v37
  %82 = vmatprep.subr.mxu0 %v36
  %83 = vmatpush1.xpose.msra.mxu0 %v35
  %84 = vmatprep.subr.mxu0 %v34
  %85 = vmatpush1.xpose.msra.mxu0 %v33
  %86 = vmatprep.subr.mxu0 %v32
  %87 = vmatpush1.xpose.msra.mxu0 %v31
  %88 = vmatprep.subr.mxu0 %v30
  %89 = vmatpush1.xpose.msra.mxu0 %v29
  %90 = vmatprep.subr.mxu0 %v28
  %91 = vmatpush1.xpose.msra.mxu0 %v27
  %92 = vmatprep.subr.mxu0 %v26
  %93 = vmatpush1.xpose.msra.mxu0 %v25
  %94 = vmatprep.subr.mxu0 %v24
  %95 = vmatpush1.xpose.msra.mxu0 %v23
  %96 = vmatprep.subr.mxu0 %v22
  %97 = vmatpush1.xpose.msra.mxu0 %v21
  %98 = vmatprep.subr.mxu0 %v20
  %99 = vmatpush1.xpose.msra.mxu0 %v19
  %100 = vmatprep.subr.mxu0 %v18
  %101 = vmatpush1.xpose.msra.mxu0 %v17
  %102 = vmatprep.subr.mxu0 0.0
  %103 = vmatpush2.xpose.msra.mxu0 0.0
  %104 = vmatprep.subr.mxu0 0.0
  %105 = vmatpush2.xpose.msra.mxu0 0.0
  %106 = vmatprep.subr.mxu0 0.0
  %107 = vmatpush2.xpose.msra.mxu0 0.0
  %108 = vmatprep.subr.mxu0 0.0
  %109 = vmatpush2.xpose.msra.mxu0 0.0
  %110 = vmatprep.subr.mxu0 0.0
  %111 = vmatpush2.xpose.msra.mxu0 0.0
  %112 = vmatprep.subr.mxu0 0.0
  %113 = vmatpush2.xpose.msra.mxu0 0.0
  %114 = vmatprep.subr.mxu0 0.0
  %115 = vmatpush2.xpose.msra.mxu0 0.0
  %116 = vmatprep.subr.mxu0 0.0
  %117 = vmatpush2.xpose.msra.mxu0 0.0
  %118 = vmatprep.subr.mxu0 0.0
  %119 = vmatpush2.xpose.msra.mxu0 0.0
  %120 = vmatprep.subr.mxu0 0.0
  %121 = vmatpush2.xpose.msra.mxu0 0.0
  %122 = vmatprep.subr.mxu0 0.0
  %123 = vmatpush2.xpose.msra.mxu0 0.0
  %124 = vmatprep.subr.mxu0 0.0
  %125 = vmatpush2.xpose.msra.mxu0 0.0
  %126 = vmatprep.subr.mxu0 0.0
  %127 = vmatpush2.xpose.msra.mxu0 0.0
  %128 = vmatprep.subr.mxu0 0.0
  %129 = vmatpush2.xpose.msra.mxu0 0.0
  %130 = vmatprep.subr.mxu0 0.0
  %131 = vmatpush2.xpose.msra.mxu0 0.0
  %132 = vmatprep.subr.mxu0 0.0
  %133 = vmatpush2.xpose.msra.mxu0 0.0
  %134 = vmatprep.mubr.f32.mxu0 %v67
  %135 = vmatmul.mubr.f32.gmra.mxu0 %v63
  %v136 = vpop.f32.mrf.mxu0
  %v137 = vadd.f32 %v58, %v136
  %v138 = vpop.f32.mrf.mxu0
  %139 = vdwg.mxu0
  %140 = vst [vmem:[%s4] sm:$0x1] %v137
  %v141 = vld [vmem:[%s2] sm:$0x1]
  %143 = vset.pattern.permute.xlu0 2
  %144 = vperm.xlu0 %143, %v141
  %v145 = vpop.permute.xlu0 %144
  %v147 = vlaneseq
  %v148 = vshrl.u32 %v147, 7
  %v149 = vsub.s32 0, %v148
  %v150 = vrot.slane %v145, %v149
  %v151 = vmul.f32 %v137, %v150
  %152 = vset.pattern.permute.xlu0 1
  %153 = vperm.xlu0 %152, %v141
  %v154 = vpop.permute.xlu0 %153
  %v156 = vlaneseq
  %v157 = vshrl.u32 %v156, 7
  %v158 = vsub.s32 0, %v157
  %v159 = vrot.slane %v154, %v158
  %v160 = vadd.f32 %v151, %v159
  %161 = vst [vmem:[%s3] sm:$0x1] %v160
  // Predicated region
  $region14: #{popart_forward.1} parent=0 // pred_check
    _
  $region15: #{popart_forward.1} parent=0 // pred_check_branch
    %163 = sbr.rel (0) target = $region17
  $region16: #{popart_forward.1} parent=0 // pred_region
    _
  $region17: #{popart_forward.1} parent=0 // pred_fallthru
    _
  // Predicated region
  $region18: #{popart_forward.1} parent=0 // pred_check
    _
  $region19: #{popart_forward.1} parent=0 // pred_check_branch
    %165 = sbr.rel (0) target = $region21
  $region20: #{popart_forward.1} parent=0 // pred_region
    _
  $region21: #{popart_forward.1} parent=0 // pred_fallthru
    _
  // Predicated region
  $region22: #{popart_forward.1} parent=0 // pred_check
    _
  $region23: #{popart_forward.1} parent=0 // pred_check_branch
    %167 = sbr.rel (0) target = $region25
  $region24: #{popart_forward.1} parent=0 // pred_region
    _
  $region25: #{popart_forward.1} parent=0 // pred_fallthru
    _
  // Predicated region
  $region26: #{popart_forward.1} parent=0 // pred_check
    _
  $region27: #{popart_forward.1} parent=0 // pred_check_branch
    %169 = sbr.rel (0) target = $region29
  $region28: #{popart_forward.1} parent=0 // pred_region
    _
  $region29: #{popart_forward.1} parent=0 // pred_fallthru
    _

</llo_original>
